<compile_context>
chip_gen: v7x
topology: tpu7x:2x2x1
jax: 0.10.0
libtpu: 0.0.40
codegen_flags: <defaults>
</compile_context>

<pallas_src>
import functools
import math

import jax
import jax.numpy as jnp
from jax import lax
from jax.experimental import pallas as pl
from jax.experimental.pallas import tpu as pltpu


def _token_mixer_kernel(x_ref, w1_ref, fb1_ref, w2_ref, fb2_ref, g2_ref, b2_ref,
                        o_ref, *, exact_gelu):
    eps = 1e-5
    x = x_ref[...].astype(jnp.float32)                     # (TR, D)

    # --- LayerNorm 1 (affine folded into fc1); two-pass mean/var ---
    mean1 = jnp.mean(x, axis=-1, keepdims=True)
    xc = x - mean1
    var1 = jnp.mean(xc * xc, axis=-1, keepdims=True)
    xn = xc * lax.rsqrt(var1 + eps)

    # --- fc1 (+ folded LN1 affine): bf16 MXU operands, f32 accumulation ---
    h = jnp.dot(xn.astype(jnp.bfloat16), w1_ref[...],
                preferred_element_type=jnp.float32) + fb1_ref[...]

    # --- GELU ---
    if exact_gelu:
        h = 0.5 * h * (1.0 + lax.erf(h * (1.0 / math.sqrt(2.0))))
    else:
        # tanh approximation runs on the EUP slot (otherwise idle here).
        h = jax.nn.gelu(h, approximate=True)
    # TODO(synk): dropout layers are identity (eval mode / p=0); not implemented.

    # --- fc2 ---
    y = jnp.dot(h.astype(jnp.bfloat16), w2_ref[...],
                preferred_element_type=jnp.float32) + fb2_ref[...]

    # --- residual add: re-read the VMEM-resident input block (no duplicate
    #     (TR, D) live range held across both matmuls) ---
    y = y + x_ref[...].astype(jnp.float32)

    # --- LayerNorm 2 (two-pass) ---
    mean2 = jnp.mean(y, axis=-1, keepdims=True)
    yc = y - mean2
    var2 = jnp.mean(yc * yc, axis=-1, keepdims=True)
    out = yc * lax.rsqrt(var2 + eps) * g2_ref[...] + b2_ref[...]

    o_ref[...] = out.astype(o_ref.dtype)


def _round_up(v, m):
    return ((v + m - 1) // m) * m


def token_mixer_tokens(x2, params, *, row_tile=512, exact_gelu=False,
                       activations_bf16=False):
    """Fused LN -> MLP -> +residual -> LN over a token-major (R, D) slab."""
    R, D = x2.shape
    g1, b1, w1t, fb1, w2t, fb2, g2, b2 = params
    H = w1t.shape[1]

    # Fold LN1 gamma/beta into fc1: (xhat*g1 + b1) @ W1t + b
    #   == xhat @ (g1[:,None] * W1t) + (b1 @ W1t + b)
    w1_fold = w1t * g1.reshape(D, 1)
    fb1_fold = fb1 + b1 @ w1t
    w1_bf = w1_fold.astype(jnp.bfloat16)       # bf16 MXU weights (halve weight VMEM/HBM)
    w2_bf = w2t.astype(jnp.bfloat16)

    io_dtype = jnp.bfloat16 if activations_bf16 else x2.dtype
    sub = 16 if io_dtype == jnp.bfloat16 else 8    # sublane multiple for the row tile

    # Row tiling: pad only to a sublane multiple of the real R (no 256-row padding),
    # and prefer >= 2 grid steps when the rows can be split into two >=sub tiles.
    R_sub = _round_up(R, sub)
    TR = max(sub, min(_round_up(row_tile, sub), R_sub))
    if pl.cdiv(R_sub, TR) < 2 and TR % (2 * sub) == 0:
        TR //= 2
    R_pad = _round_up(R, TR)

    x2 = x2.astype(io_dtype)
    if R_pad != R:
        x2 = jnp.pad(x2, ((0, R_pad - R), (0, 0)))

    kernel = functools.partial(_token_mixer_kernel, exact_gelu=exact_gelu)
    row_spec = pl.BlockSpec((TR, D), lambda i: (i, 0))

    def build(single_buffer_weights):
        def pinned(shape):
            # Constant index_map -> fetched once, VMEM-resident across all grid steps.
            if single_buffer_weights:
                return pl.BlockSpec(shape, lambda i: (0, 0),
                                    pipeline_mode=pl.Buffered(1))
            return pl.BlockSpec(shape, lambda i: (0, 0))

        return pl.pallas_call(
            kernel,
            out_shape=jax.ShapeDtypeStruct((R_pad, D), io_dtype),
            grid=(R_pad // TR,),
            in_specs=[
                row_spec,         # x rows
                pinned((D, H)),   # fc1 W^T (bf16, LN1 affine folded in)
                pinned((1, H)),   # fc1 bias (folded)
                pinned((H, D)),   # fc2 W^T (bf16)
                pinned((1, D)),   # fc2 bias
                pinned((1, D)),   # gamma2
                pinned((1, D)),   # beta2
            ],
            out_specs=row_spec,
            compiler_params=pltpu.CompilerParams(
                dimension_semantics=("parallel",),
                vmem_limit_bytes=64 * 1024 * 1024,
            ),
        )

    args = (x2, w1_bf, fb1_fold, w2_bf, fb2, g2, b2)
    try:
        # Constant-index weight blocks never re-fetch, so single-buffering them
        # halves resident weight VMEM (matters once D*H is large).
        out2 = build(True)(*args)
    except Exception:
        # TODO(synk): pl.Buffered(1) pipeline_mode unsupported on this JAX version;
        # fall back to default double-buffered pinned weights.
        out2 = build(False)(*args)

    if R_pad != R:
        out2 = out2[:R]
    return out2


def token_mixer_forward(x, params, *, num_features, segments_nr, sensor_channel,
                        row_tile=512, exact_gelu=False, activations_bf16=False):
    """x: (B, num_features, segments_nr, sensor_channel) -> same shape."""
    B = x.shape[0]
    D = num_features * segments_nr
    R = B * sensor_channel
    # TODO(synk): this permute+reshape is module-boundary XLA glue (one extra HBM
    # pass each way); it is not expressible as a rectangular BlockSpec window. In a
    # mixer stack, keep activations token-major and call token_mixer_tokens() per
    # layer so this layout change happens only once at the model boundary.
    x2 = jnp.transpose(x, (0, 3, 2, 1)).reshape(R, D)
    out2 = token_mixer_tokens(x2, params, row_tile=row_tile, exact_gelu=exact_gelu,
                              activations_bf16=activations_bf16)
    out = out2.astype(x.dtype).reshape(B, sensor_channel, segments_nr, num_features)
    return jnp.transpose(out, (0, 3, 2, 1))


def token_mixer_reference(x, params, *, num_features, segments_nr, sensor_channel):
    """Pure-JAX f32 reference mirroring the torch module (exact erf GELU)."""
    g1, b1, w1t, fb1, w2t, fb2, g2, b2 = params
    B = x.shape[0]
    D = num_features * segments_nr
    x2 = jnp.transpose(x, (0, 3, 2, 1)).reshape(B, sensor_channel, D)

    def ln(v, g, b):
        m = jnp.mean(v, axis=-1, keepdims=True)
        c = v - m
        var = jnp.mean(c * c, axis=-1, keepdims=True)
        return c * lax.rsqrt(var + 1e-5) * g + b

    resid = x2
    h = ln(x2, g1, b1) @ w1t + fb1
    h = 0.5 * h * (1.0 + lax.erf(h * (1.0 / math.sqrt(2.0))))
    y = h @ w2t + fb2 + resid
    y = ln(y, g2, b2)
    y = y.reshape(B, sensor_channel, segments_nr, num_features)
    return jnp.transpose(y, (0, 3, 2, 1))


def init_params(key, num_features, segments_nr, expansion_factor):
    D = num_features * segments_nr
    H = D * expansion_factor
    k1, k2, k3, k4 = jax.random.split(key, 4)
    # LayerNorm defaults: gamma=1, beta=0
    g1 = jnp.ones((1, D), jnp.float32)
    b1 = jnp.zeros((1, D), jnp.float32)
    g2 = jnp.ones((1, D), jnp.float32)
    b2 = jnp.zeros((1, D), jnp.float32)
    # Linear weights stored transposed for row-major matmul: fc1 W^T (D,H), fc2 W^T (H,D)
    bound1 = 1.0 / math.sqrt(D)
    bound2 = 1.0 / math.sqrt(H)
    w1t = jax.random.uniform(k1, (D, H), jnp.float32, -bound1, bound1)
    fb1 = jax.random.uniform(k2, (1, H), jnp.float32, -bound1, bound1)
    w2t = jax.random.uniform(k3, (H, D), jnp.float32, -bound2, bound2)
    fb2 = jax.random.uniform(k4, (1, D), jnp.float32, -bound2, bound2)
    return (g1, b1, w1t, fb1, w2t, fb2, g2, b2)


if __name__ == "__main__":
    # x: (B, num_features, segments_nr, sensor_channel); D = 8*16 = 128, H = 256.
    B, num_features, segments_nr, sensor_channel = 2, 8, 16, 4
    expansion_factor = 2

    key = jax.random.PRNGKey(0)
    kx, kp = jax.random.split(key)
    x = jax.random.normal(kx, (B, num_features, segments_nr, sensor_channel), jnp.float32)
    params = init_params(kp, num_features, segments_nr, expansion_factor)

    out = token_mixer_forward(
        x, params,
        num_features=num_features,
        segments_nr=segments_nr,
        sensor_channel=sensor_channel,
    )
    out = jax.block_until_ready(out)
    assert out.shape == x.shape

    ref = jax.block_until_ready(
        token_mixer_reference(x, params, num_features=num_features,
                              segments_nr=segments_nr,
                              sensor_channel=sensor_channel))
    # bf16 MXU operands + tanh-GELU vs the f32/erf reference: loose tolerance.
    assert bool(jnp.allclose(out, ref, atol=5e-2, rtol=5e-2)), \
        float(jnp.max(jnp.abs(out - ref)))

    print("KERNEL_OK")
</pallas_src>

<mosaic_0001>
module attributes {stable_mosaic.version = 11 : i64} {
  func.func @_token_mixer_kernel(%arg0: i32, %arg1: memref<8x128xf32, #tpu.memory_space<vmem>>, %arg2: memref<128x256xbf16, #tpu.memory_space<vmem>>, %arg3: memref<1x256xf32, #tpu.memory_space<vmem>>, %arg4: memref<256x128xbf16, #tpu.memory_space<vmem>>, %arg5: memref<1x128xf32, #tpu.memory_space<vmem>>, %arg6: memref<1x128xf32, #tpu.memory_space<vmem>>, %arg7: memref<1x128xf32, #tpu.memory_space<vmem>>, %arg8: memref<8x128xf32, #tpu.memory_space<vmem>>) attributes {dimension_semantics = [#tpu.dimension_semantics<parallel>], iteration_bounds = array<i64: 1>, scalar_prefetch = 0 : i64, scratch_operands = 0 : i64, tpu.core_type = #tpu.core_type<tc>, window_params = [{transform_indices = @transform_0, window_bounds = array<i64: 8, 128>}, {pipeline_mode = #tpu.pipeline_mode<synchronous>, transform_indices = @transform_1, window_bounds = array<i64: 128, 256>}, {pipeline_mode = #tpu.pipeline_mode<synchronous>, transform_indices = @transform_2, window_bounds = array<i64: 1, 256>}, {pipeline_mode = #tpu.pipeline_mode<synchronous>, transform_indices = @transform_3, window_bounds = array<i64: 256, 128>}, {pipeline_mode = #tpu.pipeline_mode<synchronous>, transform_indices = @transform_4, window_bounds = array<i64: 1, 128>}, {pipeline_mode = #tpu.pipeline_mode<synchronous>, transform_indices = @transform_5, window_bounds = array<i64: 1, 128>}, {pipeline_mode = #tpu.pipeline_mode<synchronous>, transform_indices = @transform_6, window_bounds = array<i64: 1, 128>}, {transform_indices = @transform_7, window_bounds = array<i64: 8, 128>}]} {
    %c0 = arith.constant 0 : index
    %c0_0 = arith.constant 0 : index
    %0 = vector.load %arg1[%c0, %c0_0] : memref<8x128xf32, #tpu.memory_space<vmem>>, vector<8x128xf32>
    %cst = arith.constant dense<0.000000e+00> : vector<8xf32>
    %1 = vector.multi_reduction <add>, %0, %cst [1] : vector<8x128xf32> to vector<8xf32>
    %2 = vector.shape_cast %1 : vector<8xf32> to vector<8x1xf32>
    %cst_1 = arith.constant 1.280000e+02 : f32
    %3 = vector.broadcast %cst_1 : f32 to vector<8x1xf32>
    %4 = arith.divf %2, %3 : vector<8x1xf32>
    %5 = vector.broadcast %4 : vector<8x1xf32> to vector<8x128xf32>
    %6 = arith.subf %0, %5 : vector<8x128xf32>
    %7 = arith.mulf %6, %6 : vector<8x128xf32>
    %cst_2 = arith.constant dense<0.000000e+00> : vector<8xf32>
    %8 = vector.multi_reduction <add>, %7, %cst_2 [1] : vector<8x128xf32> to vector<8xf32>
    %9 = vector.shape_cast %8 : vector<8xf32> to vector<8x1xf32>
    %cst_3 = arith.constant 1.280000e+02 : f32
    %10 = vector.broadcast %cst_3 : f32 to vector<8x1xf32>
    %11 = arith.divf %9, %10 : vector<8x1xf32>
    %cst_4 = arith.constant 9.99999974E-6 : f32
    %12 = vector.broadcast %cst_4 : f32 to vector<8x1xf32>
    %13 = arith.addf %11, %12 : vector<8x1xf32>
    %14 = math.rsqrt %13 : vector<8x1xf32>
    %15 = vector.broadcast %14 : vector<8x1xf32> to vector<8x128xf32>
    %16 = arith.mulf %6, %15 : vector<8x128xf32>
    %17 = arith.truncf %16 : vector<8x128xf32> to vector<8x128xbf16>
    %c0_5 = arith.constant 0 : index
    %c0_6 = arith.constant 0 : index
    %18 = vector.load %arg2[%c0_5, %c0_6] : memref<128x256xbf16, #tpu.memory_space<vmem>>, vector<128x256xbf16>
    %cst_7 = arith.constant dense<0.000000e+00> : vector<8x256xf32>
    %19 = tpu.matmul %17, %18, %cst_7 {dimension_numbers = #tpu.dot_dimension_numbers<[1], [0], [0], [1], [0, 0, 1, 1], [], []>} : vector<8x128xbf16>, vector<128x256xbf16>, vector<8x256xf32> -> vector<8x256xf32>
    %c0_8 = arith.constant 0 : index
    %c0_9 = arith.constant 0 : index
    %20 = vector.load %arg3[%c0_8, %c0_9] : memref<1x256xf32, #tpu.memory_space<vmem>>, vector<1x256xf32>
    %21 = vector.broadcast %20 : vector<1x256xf32> to vector<8x256xf32>
    %22 = arith.addf %19, %21 : vector<8x256xf32>
    %23 = arith.mulf %22, %22 : vector<8x256xf32>
    %24 = arith.mulf %22, %23 : vector<8x256xf32>
    %cst_10 = arith.constant 4.471500e-02 : f32
    %25 = vector.broadcast %cst_10 : f32 to vector<8x256xf32>
    %26 = arith.mulf %25, %24 : vector<8x256xf32>
    %27 = arith.addf %22, %26 : vector<8x256xf32>
    %cst_11 = arith.constant 0.797884583 : f32
    %28 = vector.broadcast %cst_11 : f32 to vector<8x256xf32>
    %29 = arith.mulf %28, %27 : vector<8x256xf32>
    %30 = math.tanh %29 : vector<8x256xf32>
    %cst_12 = arith.constant 1.000000e+00 : f32
    %31 = vector.broadcast %cst_12 : f32 to vector<8x256xf32>
    %32 = arith.addf %31, %30 : vector<8x256xf32>
    %cst_13 = arith.constant 5.000000e-01 : f32
    %33 = vector.broadcast %cst_13 : f32 to vector<8x256xf32>
    %34 = arith.mulf %33, %32 : vector<8x256xf32>
    %35 = arith.mulf %22, %34 : vector<8x256xf32>
    %36 = arith.truncf %35 : vector<8x256xf32> to vector<8x256xbf16>
    %c0_14 = arith.constant 0 : index
    %c0_15 = arith.constant 0 : index
    %37 = vector.load %arg4[%c0_14, %c0_15] : memref<256x128xbf16, #tpu.memory_space<vmem>>, vector<256x128xbf16>
    %cst_16 = arith.constant dense<0.000000e+00> : vector<8x128xf32>
    %38 = tpu.matmul %36, %37, %cst_16 {dimension_numbers = #tpu.dot_dimension_numbers<[1], [0], [0], [1], [0, 0, 1, 1], [], []>} : vector<8x256xbf16>, vector<256x128xbf16>, vector<8x128xf32> -> vector<8x128xf32>
    %c0_17 = arith.constant 0 : index
    %c0_18 = arith.constant 0 : index
    %39 = vector.load %arg5[%c0_17, %c0_18] : memref<1x128xf32, #tpu.memory_space<vmem>>, vector<1x128xf32>
    %40 = vector.broadcast %39 : vector<1x128xf32> to vector<8x128xf32>
    %41 = arith.addf %38, %40 : vector<8x128xf32>
    %c0_19 = arith.constant 0 : index
    %c0_20 = arith.constant 0 : index
    %42 = vector.load %arg1[%c0_19, %c0_20] : memref<8x128xf32, #tpu.memory_space<vmem>>, vector<8x128xf32>
    %43 = arith.addf %41, %42 : vector<8x128xf32>
    %cst_21 = arith.constant dense<0.000000e+00> : vector<8xf32>
    %44 = vector.multi_reduction <add>, %43, %cst_21 [1] : vector<8x128xf32> to vector<8xf32>
    %45 = vector.shape_cast %44 : vector<8xf32> to vector<8x1xf32>
    %cst_22 = arith.constant 1.280000e+02 : f32
    %46 = vector.broadcast %cst_22 : f32 to vector<8x1xf32>
    %47 = arith.divf %45, %46 : vector<8x1xf32>
    %48 = vector.broadcast %47 : vector<8x1xf32> to vector<8x128xf32>
    %49 = arith.subf %43, %48 : vector<8x128xf32>
    %50 = arith.mulf %49, %49 : vector<8x128xf32>
    %cst_23 = arith.constant dense<0.000000e+00> : vector<8xf32>
    %51 = vector.multi_reduction <add>, %50, %cst_23 [1] : vector<8x128xf32> to vector<8xf32>
    %52 = vector.shape_cast %51 : vector<8xf32> to vector<8x1xf32>
    %cst_24 = arith.constant 1.280000e+02 : f32
    %53 = vector.broadcast %cst_24 : f32 to vector<8x1xf32>
    %54 = arith.divf %52, %53 : vector<8x1xf32>
    %cst_25 = arith.constant 9.99999974E-6 : f32
    %55 = vector.broadcast %cst_25 : f32 to vector<8x1xf32>
    %56 = arith.addf %54, %55 : vector<8x1xf32>
    %57 = math.rsqrt %56 : vector<8x1xf32>
    %58 = vector.broadcast %57 : vector<8x1xf32> to vector<8x128xf32>
    %59 = arith.mulf %49, %58 : vector<8x128xf32>
    %c0_26 = arith.constant 0 : index
    %c0_27 = arith.constant 0 : index
    %60 = vector.load %arg6[%c0_26, %c0_27] : memref<1x128xf32, #tpu.memory_space<vmem>>, vector<1x128xf32>
    %61 = vector.broadcast %60 : vector<1x128xf32> to vector<8x128xf32>
    %62 = arith.mulf %59, %61 : vector<8x128xf32>
    %c0_28 = arith.constant 0 : index
    %c0_29 = arith.constant 0 : index
    %63 = vector.load %arg7[%c0_28, %c0_29] : memref<1x128xf32, #tpu.memory_space<vmem>>, vector<1x128xf32>
    %64 = vector.broadcast %63 : vector<1x128xf32> to vector<8x128xf32>
    %65 = arith.addf %62, %64 : vector<8x128xf32>
    %c0_30 = arith.constant 0 : index
    %c0_31 = arith.constant 0 : index
    %66 = vector.load %arg8[%c0_30, %c0_31] : memref<8x128xf32, #tpu.memory_space<vmem>>, vector<8x128xf32>
    tpu.vector_store %arg8[%c0_30, %c0_31], %65 {strides = array<i32>} : memref<8x128xf32, #tpu.memory_space<vmem>>, vector<8x128xf32>,
    return
  }
  func.func @transform_0(%arg0: i32) -> (i32, i32) {
    %c0_i32 = arith.constant 0 : i32
    %c0_i32_0 = arith.constant 0 : i32
    return %arg0, %c0_i32 : i32, i32
  }
  func.func @transform_1(%arg0: i32) -> (i32, i32) {
    %c0_i32 = arith.constant 0 : i32
    %c0_i32_0 = arith.constant 0 : i32
    %c0_i32_1 = arith.constant 0 : i32
    return %c0_i32, %c0_i32_0 : i32, i32
  }
  func.func @transform_2(%arg0: i32) -> (i32, i32) {
    %c0_i32 = arith.constant 0 : i32
    %c0_i32_0 = arith.constant 0 : i32
    %c0_i32_1 = arith.constant 0 : i32
    return %c0_i32, %c0_i32_0 : i32, i32
  }
  func.func @transform_3(%arg0: i32) -> (i32, i32) {
    %c0_i32 = arith.constant 0 : i32
    %c0_i32_0 = arith.constant 0 : i32
    %c0_i32_1 = arith.constant 0 : i32
    return %c0_i32, %c0_i32_0 : i32, i32
  }
  func.func @transform_4(%arg0: i32) -> (i32, i32) {
    %c0_i32 = arith.constant 0 : i32
    %c0_i32_0 = arith.constant 0 : i32
    %c0_i32_1 = arith.constant 0 : i32
    return %c0_i32, %c0_i32_0 : i32, i32
  }
  func.func @transform_5(%arg0: i32) -> (i32, i32) {
    %c0_i32 = arith.constant 0 : i32
    %c0_i32_0 = arith.constant 0 : i32
    %c0_i32_1 = arith.constant 0 : i32
    return %c0_i32, %c0_i32_0 : i32, i32
  }
  func.func @transform_6(%arg0: i32) -> (i32, i32) {
    %c0_i32 = arith.constant 0 : i32
    %c0_i32_0 = arith.constant 0 : i32
    %c0_i32_1 = arith.constant 0 : i32
    return %c0_i32, %c0_i32_0 : i32, i32
  }
  func.func @transform_7(%arg0: i32) -> (i32, i32) {
    %c0_i32 = arith.constant 0 : i32
    %c0_i32_0 = arith.constant 0 : i32
    return %arg0, %c0_i32 : i32, i32
  }
}

module attributes {stable_mosaic.version = 11 : i64} {
  func.func @_token_mixer_kernel(%arg0: i32, %arg1: memref<8x128xf32, #tpu.memory_space<vmem>>, %arg2: memref<128x256xbf16, #tpu.memory_space<vmem>>, %arg3: memref<1x256xf32, #tpu.memory_space<vmem>>, %arg4: memref<256x128xbf16, #tpu.memory_space<vmem>>, %arg5: memref<1x128xf32, #tpu.memory_space<vmem>>, %arg6: memref<1x128xf32, #tpu.memory_space<vmem>>, %arg7: memref<1x128xf32, #tpu.memory_space<vmem>>, %arg8: memref<8x128xf32, #tpu.memory_space<vmem>>) attributes {dimension_semantics = [#tpu.dimension_semantics<parallel>], iteration_bounds = array<i64: 1>, scalar_prefetch = 0 : i64, scratch_operands = 0 : i64, tpu.core_type = #tpu.core_type<tc>, window_params = [{transform_indices = @transform_0, window_bounds = array<i64: 8, 128>}, {pipeline_mode = #tpu.pipeline_mode<synchronous>, transform_indices = @transform_1, window_bounds = array<i64: 128, 256>}, {pipeline_mode = #tpu.pipeline_mode<synchronous>, transform_indices = @transform_2, window_bounds = array<i64: 1, 256>}, {pipeline_mode = #tpu.pipeline_mode<synchronous>, transform_indices = @transform_3, window_bounds = array<i64: 256, 128>}, {pipeline_mode = #tpu.pipeline_mode<synchronous>, transform_indices = @transform_4, window_bounds = array<i64: 1, 128>}, {pipeline_mode = #tpu.pipeline_mode<synchronous>, transform_indices = @transform_5, window_bounds = array<i64: 1, 128>}, {pipeline_mode = #tpu.pipeline_mode<synchronous>, transform_indices = @transform_6, window_bounds = array<i64: 1, 128>}, {transform_indices = @transform_7, window_bounds = array<i64: 8, 128>}]} {
    %c0 = arith.constant 0 : index
    %c0_0 = arith.constant 0 : index
    %0 = vector.load %arg1[%c0, %c0_0] : memref<8x128xf32, #tpu.memory_space<vmem>>, vector<8x128xf32>
    %cst = arith.constant dense<0.000000e+00> : vector<8xf32>
    %1 = vector.multi_reduction <add>, %0, %cst [1] : vector<8x128xf32> to vector<8xf32>
    %2 = vector.shape_cast %1 : vector<8xf32> to vector<8x1xf32>
    %cst_1 = arith.constant 1.280000e+02 : f32
    %3 = vector.broadcast %cst_1 : f32 to vector<8x1xf32>
    %4 = arith.divf %2, %3 : vector<8x1xf32>
    %5 = vector.broadcast %4 : vector<8x1xf32> to vector<8x128xf32>
    %6 = arith.subf %0, %5 : vector<8x128xf32>
    %7 = arith.mulf %6, %6 : vector<8x128xf32>
    %cst_2 = arith.constant dense<0.000000e+00> : vector<8xf32>
    %8 = vector.multi_reduction <add>, %7, %cst_2 [1] : vector<8x128xf32> to vector<8xf32>
    %9 = vector.shape_cast %8 : vector<8xf32> to vector<8x1xf32>
    %cst_3 = arith.constant 1.280000e+02 : f32
    %10 = vector.broadcast %cst_3 : f32 to vector<8x1xf32>
    %11 = arith.divf %9, %10 : vector<8x1xf32>
    %cst_4 = arith.constant 9.99999974E-6 : f32
    %12 = vector.broadcast %cst_4 : f32 to vector<8x1xf32>
    %13 = arith.addf %11, %12 : vector<8x1xf32>
    %14 = math.rsqrt %13 : vector<8x1xf32>
    %15 = vector.broadcast %14 : vector<8x1xf32> to vector<8x128xf32>
    %16 = arith.mulf %6, %15 : vector<8x128xf32>
    %17 = arith.truncf %16 : vector<8x128xf32> to vector<8x128xbf16>
    %c0_5 = arith.constant 0 : index
    %c0_6 = arith.constant 0 : index
    %18 = vector.load %arg2[%c0_5, %c0_6] : memref<128x256xbf16, #tpu.memory_space<vmem>>, vector<128x256xbf16>
    %cst_7 = arith.constant dense<0.000000e+00> : vector<8x256xf32>
    %19 = tpu.matmul %17, %18, %cst_7 {dimension_numbers = #tpu.dot_dimension_numbers<[1], [0], [0], [1], [0, 0, 1, 1], [], []>} : vector<8x128xbf16>, vector<128x256xbf16>, vector<8x256xf32> -> vector<8x256xf32>
    %c0_8 = arith.constant 0 : index
    %c0_9 = arith.constant 0 : index
    %20 = vector.load %arg3[%c0_8, %c0_9] : memref<1x256xf32, #tpu.memory_space<vmem>>, vector<1x256xf32>
    %21 = vector.broadcast %20 : vector<1x256xf32> to vector<8x256xf32>
    %22 = arith.addf %19, %21 : vector<8x256xf32>
    %23 = arith.mulf %22, %22 : vector<8x256xf32>
    %24 = arith.mulf %22, %23 : vector<8x256xf32>
    %cst_10 = arith.constant 4.471500e-02 : f32
    %25 = vector.broadcast %cst_10 : f32 to vector<8x256xf32>
    %26 = arith.mulf %25, %24 : vector<8x256xf32>
    %27 = arith.addf %22, %26 : vector<8x256xf32>
    %cst_11 = arith.constant 0.797884583 : f32
    %28 = vector.broadcast %cst_11 : f32 to vector<8x256xf32>
    %29 = arith.mulf %28, %27 : vector<8x256xf32>
    %30 = math.tanh %29 : vector<8x256xf32>
    %cst_12 = arith.constant 1.000000e+00 : f32
    %31 = vector.broadcast %cst_12 : f32 to vector<8x256xf32>
    %32 = arith.addf %31, %30 : vector<8x256xf32>
    %cst_13 = arith.constant 5.000000e-01 : f32
    %33 = vector.broadcast %cst_13 : f32 to vector<8x256xf32>
    %34 = arith.mulf %33, %32 : vector<8x256xf32>
    %35 = arith.mulf %22, %34 : vector<8x256xf32>
    %36 = arith.truncf %35 : vector<8x256xf32> to vector<8x256xbf16>
    %c0_14 = arith.constant 0 : index
    %c0_15 = arith.constant 0 : index
    %37 = vector.load %arg4[%c0_14, %c0_15] : memref<256x128xbf16, #tpu.memory_space<vmem>>, vector<256x128xbf16>
    %cst_16 = arith.constant dense<0.000000e+00> : vector<8x128xf32>
    %38 = tpu.matmul %36, %37, %cst_16 {dimension_numbers = #tpu.dot_dimension_numbers<[1], [0], [0], [1], [0, 0, 1, 1], [], []>} : vector<8x256xbf16>, vector<256x128xbf16>, vector<8x128xf32> -> vector<8x128xf32>
    %c0_17 = arith.constant 0 : index
    %c0_18 = arith.constant 0 : index
    %39 = vector.load %arg5[%c0_17, %c0_18] : memref<1x128xf32, #tpu.memory_space<vmem>>, vector<1x128xf32>
    %40 = vector.broadcast %39 : vector<1x128xf32> to vector<8x128xf32>
    %41 = arith.addf %38, %40 : vector<8x128xf32>
    %c0_19 = arith.constant 0 : index
    %c0_20 = arith.constant 0 : index
    %42 = vector.load %arg1[%c0_19, %c0_20] : memref<8x128xf32, #tpu.memory_space<vmem>>, vector<8x128xf32>
    %43 = arith.addf %41, %42 : vector<8x128xf32>
    %cst_21 = arith.constant dense<0.000000e+00> : vector<8xf32>
    %44 = vector.multi_reduction <add>, %43, %cst_21 [1] : vector<8x128xf32> to vector<8xf32>
    %45 = vector.shape_cast %44 : vector<8xf32> to vector<8x1xf32>
    %cst_22 = arith.constant 1.280000e+02 : f32
    %46 = vector.broadcast %cst_22 : f32 to vector<8x1xf32>
    %47 = arith.divf %45, %46 : vector<8x1xf32>
    %48 = vector.broadcast %47 : vector<8x1xf32> to vector<8x128xf32>
    %49 = arith.subf %43, %48 : vector<8x128xf32>
    %50 = arith.mulf %49, %49 : vector<8x128xf32>
    %cst_23 = arith.constant dense<0.000000e+00> : vector<8xf32>
    %51 = vector.multi_reduction <add>, %50, %cst_23 [1] : vector<8x128xf32> to vector<8xf32>
    %52 = vector.shape_cast %51 : vector<8xf32> to vector<8x1xf32>
    %cst_24 = arith.constant 1.280000e+02 : f32
    %53 = vector.broadcast %cst_24 : f32 to vector<8x1xf32>
    %54 = arith.divf %52, %53 : vector<8x1xf32>
    %cst_25 = arith.constant 9.99999974E-6 : f32
    %55 = vector.broadcast %cst_25 : f32 to vector<8x1xf32>
    %56 = arith.addf %54, %55 : vector<8x1xf32>
    %57 = math.rsqrt %56 : vector<8x1xf32>
    %58 = vector.broadcast %57 : vector<8x1xf32> to vector<8x128xf32>
    %59 = arith.mulf %49, %58 : vector<8x128xf32>
    %c0_26 = arith.constant 0 : index
    %c0_27 = arith.constant 0 : index
    %60 = vector.load %arg6[%c0_26, %c0_27] : memref<1x128xf32, #tpu.memory_space<vmem>>, vector<1x128xf32>
    %61 = vector.broadcast %60 : vector<1x128xf32> to vector<8x128xf32>
    %62 = arith.mulf %59, %61 : vector<8x128xf32>
    %c0_28 = arith.constant 0 : index
    %c0_29 = arith.constant 0 : index
    %63 = vector.load %arg7[%c0_28, %c0_29] : memref<1x128xf32, #tpu.memory_space<vmem>>, vector<1x128xf32>
    %64 = vector.broadcast %63 : vector<1x128xf32> to vector<8x128xf32>
    %65 = arith.addf %62, %64 : vector<8x128xf32>
    %c0_30 = arith.constant 0 : index
    %c0_31 = arith.constant 0 : index
    %66 = vector.load %arg8[%c0_30, %c0_31] : memref<8x128xf32, #tpu.memory_space<vmem>>, vector<8x128xf32>
    tpu.vector_store %arg8[%c0_30, %c0_31], %65 {strides = array<i32>} : memref<8x128xf32, #tpu.memory_space<vmem>>, vector<8x128xf32>,
    return
  }
  func.func @transform_0(%arg0: i32) -> (i32, i32) {
    %c0_i32 = arith.constant 0 : i32
    %c0_i32_0 = arith.constant 0 : i32
    return %arg0, %c0_i32 : i32, i32
  }
  func.func @transform_1(%arg0: i32) -> (i32, i32) {
    %c0_i32 = arith.constant 0 : i32
    %c0_i32_0 = arith.constant 0 : i32
    %c0_i32_1 = arith.constant 0 : i32
    return %c0_i32, %c0_i32_0 : i32, i32
  }
  func.func @transform_2(%arg0: i32) -> (i32, i32) {
    %c0_i32 = arith.constant 0 : i32
    %c0_i32_0 = arith.constant 0 : i32
    %c0_i32_1 = arith.constant 0 : i32
    return %c0_i32, %c0_i32_0 : i32, i32
  }
  func.func @transform_3(%arg0: i32) -> (i32, i32) {
    %c0_i32 = arith.constant 0 : i32
    %c0_i32_0 = arith.constant 0 : i32
    %c0_i32_1 = arith.constant 0 : i32
    return %c0_i32, %c0_i32_0 : i32, i32
  }
  func.func @transform_4(%arg0: i32) -> (i32, i32) {
    %c0_i32 = arith.constant 0 : i32
    %c0_i32_0 = arith.constant 0 : i32
    %c0_i32_1 = arith.constant 0 : i32
    return %c0_i32, %c0_i32_0 : i32, i32
  }
  func.func @transform_5(%arg0: i32) -> (i32, i32) {
    %c0_i32 = arith.constant 0 : i32
    %c0_i32_0 = arith.constant 0 : i32
    %c0_i32_1 = arith.constant 0 : i32
    return %c0_i32, %c0_i32_0 : i32, i32
  }
  func.func @transform_6(%arg0: i32) -> (i32, i32) {
    %c0_i32 = arith.constant 0 : i32
    %c0_i32_0 = arith.constant 0 : i32
    %c0_i32_1 = arith.constant 0 : i32
    return %c0_i32, %c0_i32_0 : i32, i32
  }
  func.func @transform_7(%arg0: i32) -> (i32, i32) {
    %c0_i32 = arith.constant 0 : i32
    %c0_i32_0 = arith.constant 0 : i32
    return %arg0, %c0_i32 : i32, i32
  }
}

</mosaic_0001>

<llo_original>
// kernel: tpu_custom_call.1
$region0: #{tpu_custom_call.1}
  #allocation0 [shape = 'u32[]', space=smem, size = 0x4, offset = 0x4, fixed_abs, tag = 'smem constant byte address 0x4 - core index']
  #allocation1 [shape = 'u32[144,128]{1,0:T(1,128)}', space=vmem, size = 0x12000, scoped, tag = 'internal scratch']
  %s0 = inlined_call_operand.hbm [shape: f32[8,128], index: 0, kind: input, shape index: {}]
  %s1 = inlined_call_operand.hbm [shape: bf16[128,256], index: 1, kind: input, shape index: {}]
  %s2 = inlined_call_operand.hbm [shape: f32[1,256], index: 2, kind: input, shape index: {}]
  %s3 = inlined_call_operand.hbm [shape: bf16[256,128], index: 3, kind: input, shape index: {}]
  %s4 = inlined_call_operand.hbm [shape: f32[1,128], index: 4, kind: input, shape index: {}]
  %s5 = inlined_call_operand.hbm [shape: f32[1,128], index: 5, kind: input, shape index: {}]
  %s6 = inlined_call_operand.hbm [shape: f32[1,128], index: 6, kind: input, shape index: {}]
  %s7 = inlined_call_operand.hbm [shape: f32[8,128], index: 7, kind: output, shape index: {}]
  %s8 = sld [smem:[#allocation0]]
  $region66: #{tpu_custom_call.1} parent=0
    _
  %s10 = ssub.s32 1, %s8
  %s11 = scalar_select 0, %s10, %s8
  $region1: #{tpu_custom_call.1} parent=0
    #allocation2 [shape = 'u8[4096]{0}', space=vmem, size = 0x1000, scoped, tag = 'input window, operand 0, single buffered']
    #allocation3 [shape = 's32[1]{0}', space=sflag, size = 0x4, scoped, tag = 'scoped memory for tpu_custom_call.1']
    #allocation4 [shape = 's32[1]{0}', space=sflag, size = 0x4, scoped, tag = 'scoped memory for tpu_custom_call.1']
    #allocation5 [shape = 'u8[65536]{0}', space=vmem, size = 0x10000, scoped, tag = 'input window, operand 1, single buffered']
    #allocation6 [shape = 's32[1]{0}', space=sflag, size = 0x4, scoped, tag = 'scoped memory for tpu_custom_call.1']
    #allocation7 [shape = 'u8[1024]{0}', space=vmem, size = 0x400, scoped, tag = 'input window, operand 2, single buffered']
    #allocation8 [shape = 'u8[65536]{0}', space=vmem, size = 0x10000, scoped, tag = 'input window, operand 3, single buffered']
    #allocation9 [shape = 's32[1]{0}', space=sflag, size = 0x4, scoped, tag = 'scoped memory for tpu_custom_call.1']
    #allocation10 [shape = 'u8[512]{0}', space=vmem, size = 0x400, scoped, tag = 'input window, operand 4, single buffered']
    #allocation11 [shape = 'u8[512]{0}', space=vmem, size = 0x400, scoped, tag = 'input window, operand 5, single buffered']
    #allocation12 [shape = 's32[1]{0}', space=sflag, size = 0x4, scoped, tag = 'scoped memory for tpu_custom_call.1']
    #allocation13 [shape = 'u8[512]{0}', space=vmem, size = 0x400, scoped, tag = 'input window, operand 6, single buffered']
    #allocation14 [shape = 'u8[4096]{0}', space=vmem, size = 0x1000, scoped, tag = 'output window, operand 0, single buffered']
    %12 = vsyncpa [#allocation3], 0
    %13 = vsyncpa [#allocation6], 0
    %14 = vsyncpa [#allocation9], 0
    %15 = vsyncpa [#allocation12], 0
    %16 = vsyncpa [#allocation4], 0
    // Predicated region
    $region2: #{tpu_custom_call.1} parent=1 // pred_check
      _
    $region3: #{tpu_custom_call.1} parent=1 // pred_check_branch
      %18 = sbr.rel (0) target = $region5
    $region4: #{tpu_custom_call.1} parent=1 // pred_region
      %s20 = ssub.s32 128, 128
      %21 = vsyncadd [#allocation3], %s20
      %s23 = sshll.u32 [#allocation2], 4
      %s24 = int_to_ptr.vmem [resolvable:$true] %s23
      %26 = dma.hbm_to_vmem [thread:$0]  %s0, 128, %s24, [#allocation3]
    $region5: #{tpu_custom_call.1} parent=1 // pred_fallthru
      _
    // Predicated region
    $region6: #{tpu_custom_call.1} parent=1 // pred_check
      _
    $region7: #{tpu_custom_call.1} parent=1 // pred_check_branch
      %28 = sbr.rel (0) target = $region9
    $region8: #{tpu_custom_call.1} parent=1 // pred_region
      %s30 = ssub.s32 2048, 2048
      %31 = vsyncadd [#allocation6], %s30
      %s32 = sshll.u32 [#allocation5], 4
      %s33 = int_to_ptr.vmem [resolvable:$true] %s32
      %38 = dma.hbm_to_vmem [thread:$0]  %s1, 2048, %s33, [#allocation6], 128, 128, 8
    $region9: #{tpu_custom_call.1} parent=1 // pred_fallthru
      _
    // Predicated region
    $region10: #{tpu_custom_call.1} parent=1 // pred_check
      _
    $region11: #{tpu_custom_call.1} parent=1 // pred_check_branch
      %40 = sbr.rel (0) target = $region13
    $region12: #{tpu_custom_call.1} parent=1 // pred_region
      %s42 = ssub.s32 32, 32
      %43 = vsyncadd [#allocation6], %s42
      %s45 = sshll.u32 [#allocation7], 4
      %s46 = int_to_ptr.vmem [resolvable:$true] %s45
      %48 = dma.hbm_to_vmem [thread:$0]  %s2, 32, %s46, [#allocation6]
    $region13: #{tpu_custom_call.1} parent=1 // pred_fallthru
      _
    // Predicated region
    $region14: #{tpu_custom_call.1} parent=1 // pred_check
      _
    $region15: #{tpu_custom_call.1} parent=1 // pred_check_branch
      %50 = sbr.rel (0) target = $region17
    $region16: #{tpu_custom_call.1} parent=1 // pred_region
      %s52 = ssub.s32 2048, 2048
      %53 = vsyncadd [#allocation9], %s52
      %s54 = sshll.u32 [#allocation8], 4
      %s55 = int_to_ptr.vmem [resolvable:$true] %s54
      %60 = dma.hbm_to_vmem [thread:$0]  %s3, 2048, %s55, [#allocation9], 64, 64, 4
    $region17: #{tpu_custom_call.1} parent=1 // pred_fallthru
      _
    // Predicated region
    $region18: #{tpu_custom_call.1} parent=1 // pred_check
      _
    $region19: #{tpu_custom_call.1} parent=1 // pred_check_branch
      %62 = sbr.rel (0) target = $region21
    $region20: #{tpu_custom_call.1} parent=1 // pred_region
      %s64 = ssub.s32 16, 16
      %65 = vsyncadd [#allocation9], %s64
      %s67 = sshll.u32 [#allocation10], 4
      %s68 = int_to_ptr.vmem [resolvable:$true] %s67
      %70 = dma.hbm_to_vmem [thread:$0]  %s4, 16, %s68, [#allocation9]
    $region21: #{tpu_custom_call.1} parent=1 // pred_fallthru
      _
    // Predicated region
    $region22: #{tpu_custom_call.1} parent=1 // pred_check
      _
    $region23: #{tpu_custom_call.1} parent=1 // pred_check_branch
      %72 = sbr.rel (0) target = $region25
    $region24: #{tpu_custom_call.1} parent=1 // pred_region
      %s74 = ssub.s32 16, 16
      %75 = vsyncadd [#allocation12], %s74
      %s77 = sshll.u32 [#allocation11], 4
      %s78 = int_to_ptr.vmem [resolvable:$true] %s77
      %80 = dma.hbm_to_vmem [thread:$0]  %s5, 16, %s78, [#allocation12]
    $region25: #{tpu_custom_call.1} parent=1 // pred_fallthru
      _
    // Predicated region
    $region26: #{tpu_custom_call.1} parent=1 // pred_check
      _
    $region27: #{tpu_custom_call.1} parent=1 // pred_check_branch
      %82 = sbr.rel (0) target = $region29
    $region28: #{tpu_custom_call.1} parent=1 // pred_region
      %s84 = ssub.s32 16, 16
      %85 = vsyncadd [#allocation12], %s84
      %s87 = sshll.u32 [#allocation13], 4
      %s88 = int_to_ptr.vmem [resolvable:$true] %s87
      %90 = dma.hbm_to_vmem [thread:$0]  %s6, 16, %s88, [#allocation12]
    $region29: #{tpu_custom_call.1} parent=1 // pred_fallthru
      _
    // Predicated region
    $region30: #{tpu_custom_call.1} parent=1 // pred_check
      _
    $region31: #{tpu_custom_call.1} parent=1 // pred_check_branch
      %92 = sbr.rel (0) target = $region33
    $region32: #{tpu_custom_call.1} parent=1 // pred_region
      %93 = dma.done [#allocation3], 128
    $region33: #{tpu_custom_call.1} parent=1 // pred_fallthru
      _
    // Predicated region
    $region34: #{tpu_custom_call.1} parent=1 // pred_check
      _
    $region35: #{tpu_custom_call.1} parent=1 // pred_check_branch
      %95 = sbr.rel (0) target = $region37
    $region36: #{tpu_custom_call.1} parent=1 // pred_region
      %96 = dma.done [#allocation6], 2048
    $region37: #{tpu_custom_call.1} parent=1 // pred_fallthru
      _
    // Predicated region
    $region38: #{tpu_custom_call.1} parent=1 // pred_check
      _
    $region39: #{tpu_custom_call.1} parent=1 // pred_check_branch
      %98 = sbr.rel (0) target = $region41
    $region40: #{tpu_custom_call.1} parent=1 // pred_region
      %99 = dma.done [#allocation6], 32
    $region41: #{tpu_custom_call.1} parent=1 // pred_fallthru
      _
    // Predicated region
    $region42: #{tpu_custom_call.1} parent=1 // pred_check
      _
    $region43: #{tpu_custom_call.1} parent=1 // pred_check_branch
      %101 = sbr.rel (0) target = $region45
    $region44: #{tpu_custom_call.1} parent=1 // pred_region
      %102 = dma.done [#allocation9], 2048
    $region45: #{tpu_custom_call.1} parent=1 // pred_fallthru
      _
    // Predicated region
    $region46: #{tpu_custom_call.1} parent=1 // pred_check
      _
    $region47: #{tpu_custom_call.1} parent=1 // pred_check_branch
      %104 = sbr.rel (0) target = $region49
    $region48: #{tpu_custom_call.1} parent=1 // pred_region
      %105 = dma.done [#allocation9], 16
    $region49: #{tpu_custom_call.1} parent=1 // pred_fallthru
      _
    // Predicated region
    $region50: #{tpu_custom_call.1} parent=1 // pred_check
      _
    $region51: #{tpu_custom_call.1} parent=1 // pred_check_branch
      %107 = sbr.rel (0) target = $region53
    $region52: #{tpu_custom_call.1} parent=1 // pred_region
      %108 = dma.done [#allocation12], 16
    $region53: #{tpu_custom_call.1} parent=1 // pred_fallthru
      _
    // Predicated region
    $region54: #{tpu_custom_call.1} parent=1 // pred_check
      _
    $region55: #{tpu_custom_call.1} parent=1 // pred_check_branch
      %110 = sbr.rel (0) target = $region57
    $region56: #{tpu_custom_call.1} parent=1 // pred_region
      %111 = dma.done [#allocation12], 16
    $region57: #{tpu_custom_call.1} parent=1 // pred_fallthru
      _
    %v113 = vld [vmem:[#allocation2] sm:$0xff]
    %114 = vadd.xlane.f32.xlu0 %v113
    %v115 = vpop.xlane.xlu0 %114
    %v116 = vrcp.pop 128.0
    %v117 = vmul.f32 %v115, %v116
    %v118 = vsub.f32 %v113, %v117
    %v119 = vmul.f32 %v118, %v118
    %120 = vadd.xlane.f32.xlu0 %v119
    %v121 = vpop.xlane.xlu0 %120
    %v122 = vmul.f32 %v121, %v116
    %v123 = vadd.f32 %v122, 1e-05
    %v124 = vrsqrt.pop %v123
    %v125 = vmul.f32 %v118, %v124
    %v126 = vpack.c.bf16 %v125, %v125
    %v127 = vld [vmem:[#allocation5] sm:$0xff]
    %v128 = vld [vmem:[#allocation5 + $0x8] sm:$0xff]
    %v129 = vld [vmem:[#allocation5 + $0x10] sm:$0xff]
    %v130 = vld [vmem:[#allocation5 + $0x18] sm:$0xff]
    %v131 = vld [vmem:[#allocation5 + $0x20] sm:$0xff]
    %v132 = vld [vmem:[#allocation5 + $0x28] sm:$0xff]
    %v133 = vld [vmem:[#allocation5 + $0x30] sm:$0xff]
    %v134 = vld [vmem:[#allocation5 + $0x38] sm:$0xff]
    %v135 = vld [vmem:[#allocation5 + $0x40] sm:$0xff]
    %v136 = vld [vmem:[#allocation5 + $0x48] sm:$0xff]
    %v137 = vld [vmem:[#allocation5 + $0x50] sm:$0xff]
    %v138 = vld [vmem:[#allocation5 + $0x58] sm:$0xff]
    %v139 = vld [vmem:[#allocation5 + $0x60] sm:$0xff]
    %v140 = vld [vmem:[#allocation5 + $0x68] sm:$0xff]
    %v141 = vld [vmem:[#allocation5 + $0x70] sm:$0xff]
    %v142 = vld [vmem:[#allocation5 + $0x78] sm:$0xff]
    %v143 = vld [vmem:[#allocation7] sm:$0x3]
    %v145 = vlaneseq
    %v146 = vshrl.u32 %v145, 7
    %v147 = vsub.s32 0, %v146
    %v148 = vrot.slane %v143, %v147
    %v149 = vlaneseq
    %v150 = vshrl.u32 %v149, 7
    %v151 = vsub.s32 1, %v150
    %v152 = vrot.slane %v143, %v151
    %v171 = vunpack.c.l.b16 %v127
    %v172 = vunpack.c.h.b16 %v127
    %v173 = vunpack.c.l.b16 %v128
    %v174 = vunpack.c.h.b16 %v128
    %v175 = vunpack.c.l.b16 %v129
    %v176 = vunpack.c.h.b16 %v129
    %v177 = vunpack.c.l.b16 %v130
    %v178 = vunpack.c.h.b16 %v130
    %v179 = vunpack.c.l.b16 %v131
    %v180 = vunpack.c.h.b16 %v131
    %v181 = vunpack.c.l.b16 %v132
    %v182 = vunpack.c.h.b16 %v132
    %v183 = vunpack.c.l.b16 %v133
    %v184 = vunpack.c.h.b16 %v133
    %v185 = vunpack.c.l.b16 %v134
    %v186 = vunpack.c.h.b16 %v134
    %v187 = vunpack.c.l.b16 %v135
    %v188 = vunpack.c.h.b16 %v135
    %v189 = vunpack.c.l.b16 %v136
    %v190 = vunpack.c.h.b16 %v136
    %v191 = vunpack.c.l.b16 %v137
    %v192 = vunpack.c.h.b16 %v137
    %v193 = vunpack.c.l.b16 %v138
    %v194 = vunpack.c.h.b16 %v138
    %v195 = vunpack.c.l.b16 %v139
    %v196 = vunpack.c.h.b16 %v139
    %v197 = vunpack.c.l.b16 %v140
    %v198 = vunpack.c.h.b16 %v140
    %v199 = vunpack.c.l.b16 %v141
    %v200 = vunpack.c.h.b16 %v141
    %v201 = vunpack.c.l.b16 %v142
    %v202 = vunpack.c.h.b16 %v142
    %v203 = vpack.c.b16 %v173, %v171
    %v204 = vpack.c.b16 %v174, %v172
    %v205 = vpack.c.b16 %v177, %v175
    %v206 = vpack.c.b16 %v178, %v176
    %v207 = vpack.c.b16 %v181, %v179
    %v208 = vpack.c.b16 %v182, %v180
    %v209 = vpack.c.b16 %v185, %v183
    %v210 = vpack.c.b16 %v186, %v184
    %v211 = vpack.c.b16 %v189, %v187
    %v212 = vpack.c.b16 %v190, %v188
    %v213 = vpack.c.b16 %v193, %v191
    %v214 = vpack.c.b16 %v194, %v192
    %v215 = vpack.c.b16 %v197, %v195
    %v216 = vpack.c.b16 %v198, %v196
    %v217 = vpack.c.b16 %v201, %v199
    %v218 = vpack.c.b16 %v202, %v200
    %235 = vmatprep.subr.bf16.mxu0 %v204
    %236 = vmatpush1.bf16.msra.mxu0 %v203
    %237 = vmatprep.subr.bf16.mxu0 %v206
    %238 = vmatpush1.bf16.msra.mxu0 %v205
    %239 = vmatprep.subr.bf16.mxu0 %v208
    %240 = vmatpush1.bf16.msra.mxu0 %v207
    %241 = vmatprep.subr.bf16.mxu0 %v210
    %242 = vmatpush1.bf16.msra.mxu0 %v209
    %243 = vmatprep.subr.bf16.mxu0 %v212
    %244 = vmatpush1.bf16.msra.mxu0 %v211
    %245 = vmatprep.subr.bf16.mxu0 %v214
    %246 = vmatpush1.bf16.msra.mxu0 %v213
    %247 = vmatprep.subr.bf16.mxu0 %v216
    %248 = vmatpush1.bf16.msra.mxu0 %v215
    %249 = vmatprep.subr.bf16.mxu0 %v218
    %250 = vmatpush1.bf16.msra.mxu0 %v217
    %251 = vmatprep.subr.bf16.mxu0 0
    %252 = vmatpush1.bf16.msra.mxu0 0
    %253 = vmatprep.subr.bf16.mxu0 0
    %254 = vmatpush1.bf16.msra.mxu0 0
    %255 = vmatprep.subr.bf16.mxu0 0
    %256 = vmatpush1.bf16.msra.mxu0 0
    %257 = vmatprep.subr.bf16.mxu0 0
    %258 = vmatpush1.bf16.msra.mxu0 0
    %259 = vmatprep.subr.bf16.mxu0 0
    %260 = vmatpush1.bf16.msra.mxu0 0
    %261 = vmatprep.subr.bf16.mxu0 0
    %262 = vmatpush1.bf16.msra.mxu0 0
    %263 = vmatprep.subr.bf16.mxu0 0
    %264 = vmatpush1.bf16.msra.mxu0 0
    %265 = vmatprep.subr.bf16.mxu0 0
    %266 = vmatpush1.bf16.msra.mxu0 0
    %267 = vmatprep.mubr.bf16.mxu0 0
    %268 = vmatmul.mubr.bf16.gmra.mrb[0].mxu0 %v126
    %v269 = vpop.f32.mrb[0].mxu0
    %v270 = vadd.f32 %v148, %v269
    %v271 = vpop.f32.mrb[0].mxu0
    %v272 = vadd.f32 %v152, %v271
    %v273 = vpop.f32.mrb[0].mxu0
    %v274 = vpop.f32.mrb[0].mxu0
    %275 = vdwg.mxu0
    %v276 = vmul.f32 %v270, %v270
    %v277 = vmul.f32 %v272, %v272
    %v278 = vmul.f32 %v270, %v276
    %v279 = vmul.f32 %v272, %v277
    %v280 = vmul.f32 %v278, 0.044715
    %v281 = vmul.f32 %v279, 0.044715
    %v282 = vadd.f32 %v270, %v280
    %v283 = vadd.f32 %v272, %v281
    %v284 = vmul.f32 %v282, 0.7978846
    %v285 = vmul.f32 %v283, 0.7978846
    %v286 = vtanh.pop %v284
    %v287 = vtanh.pop %v285
    %v288 = vadd.f32 %v286, 1.0
    %v289 = vadd.f32 %v287, 1.0
    %v290 = vmul.f32 %v288, 0.5
    %v291 = vmul.f32 %v289, 0.5
    %v292 = vmul.f32 %v270, %v290
    %v293 = vmul.f32 %v272, %v291
    %v294 = vpack.c.bf16 %v292, %v292
    %v295 = vpack.c.bf16 %v293, %v293
    %v296 = vld [vmem:[#allocation8] sm:$0xf]
    %v297 = vld [vmem:[#allocation8 + $0x4] sm:$0xf]
    %v298 = vld [vmem:[#allocation8 + $0x8] sm:$0xf]
    %v299 = vld [vmem:[#allocation8 + $0xc] sm:$0xf]
    %v300 = vld [vmem:[#allocation8 + $0x10] sm:$0xf]
    %v301 = vld [vmem:[#allocation8 + $0x14] sm:$0xf]
    %v302 = vld [vmem:[#allocation8 + $0x18] sm:$0xf]
    %v303 = vld [vmem:[#allocation8 + $0x1c] sm:$0xf]
    %v304 = vld [vmem:[#allocation8 + $0x20] sm:$0xf]
    %v305 = vld [vmem:[#allocation8 + $0x24] sm:$0xf]
    %v306 = vld [vmem:[#allocation8 + $0x28] sm:$0xf]
    %v307 = vld [vmem:[#allocation8 + $0x2c] sm:$0xf]
    %v308 = vld [vmem:[#allocation8 + $0x30] sm:$0xf]
    %v309 = vld [vmem:[#allocation8 + $0x34] sm:$0xf]
    %v310 = vld [vmem:[#allocation8 + $0x38] sm:$0xf]
    %v311 = vld [vmem:[#allocation8 + $0x3c] sm:$0xf]
    %v312 = vld [vmem:[#allocation8 + $0x40] sm:$0xf]
    %v313 = vld [vmem:[#allocation8 + $0x44] sm:$0xf]
    %v314 = vld [vmem:[#allocation8 + $0x48] sm:$0xf]
    %v315 = vld [vmem:[#allocation8 + $0x4c] sm:$0xf]
    %v316 = vld [vmem:[#allocation8 + $0x50] sm:$0xf]
    %v317 = vld [vmem:[#allocation8 + $0x54] sm:$0xf]
    %v318 = vld [vmem:[#allocation8 + $0x58] sm:$0xf]
    %v319 = vld [vmem:[#allocation8 + $0x5c] sm:$0xf]
    %v320 = vld [vmem:[#allocation8 + $0x60] sm:$0xf]
    %v321 = vld [vmem:[#allocation8 + $0x64] sm:$0xf]
    %v322 = vld [vmem:[#allocation8 + $0x68] sm:$0xf]
    %v323 = vld [vmem:[#allocation8 + $0x6c] sm:$0xf]
    %v324 = vld [vmem:[#allocation8 + $0x70] sm:$0xf]
    %v325 = vld [vmem:[#allocation8 + $0x74] sm:$0xf]
    %v326 = vld [vmem:[#allocation8 + $0x78] sm:$0xf]
    %v327 = vld [vmem:[#allocation8 + $0x7c] sm:$0xf]
    %v328 = vld [vmem:[#allocation10] sm:$0x1]
    %v330 = vlaneseq
    %v331 = vshrl.u32 %v330, 7
    %v332 = vsub.s32 0, %v331
    %v333 = vrot.slane %v328, %v332
    %v367 = vunpack.c.l.b16 %v296
    %v368 = vunpack.c.l.b16 %v297
    %v369 = vunpack.c.l.b16 %v298
    %v370 = vunpack.c.l.b16 %v299
    %v371 = vunpack.c.l.b16 %v300
    %v372 = vunpack.c.l.b16 %v301
    %v373 = vunpack.c.l.b16 %v302
    %v374 = vunpack.c.l.b16 %v303
    %v375 = vunpack.c.l.b16 %v304
    %v376 = vunpack.c.l.b16 %v305
    %v377 = vunpack.c.l.b16 %v306
    %v378 = vunpack.c.l.b16 %v307
    %v379 = vunpack.c.l.b16 %v308
    %v380 = vunpack.c.l.b16 %v309
    %v381 = vunpack.c.l.b16 %v310
    %v382 = vunpack.c.l.b16 %v311
    %v383 = vunpack.c.l.b16 %v312
    %v384 = vunpack.c.l.b16 %v313
    %v385 = vunpack.c.l.b16 %v314
    %v386 = vunpack.c.l.b16 %v315
    %v387 = vunpack.c.l.b16 %v316
    %v388 = vunpack.c.l.b16 %v317
    %v389 = vunpack.c.l.b16 %v318
    %v390 = vunpack.c.l.b16 %v319
    %v391 = vunpack.c.l.b16 %v320
    %v392 = vunpack.c.l.b16 %v321
    %v393 = vunpack.c.l.b16 %v322
    %v394 = vunpack.c.l.b16 %v323
    %v395 = vunpack.c.l.b16 %v324
    %v396 = vunpack.c.l.b16 %v325
    %v397 = vunpack.c.l.b16 %v326
    %v398 = vunpack.c.l.b16 %v327
    %v399 = vpack.c.b16 %v368, %v367
    %v400 = vpack.c.b16 %v370, %v369
    %v401 = vpack.c.b16 %v372, %v371
    %v402 = vpack.c.b16 %v374, %v373
    %v403 = vpack.c.b16 %v376, %v375
    %v404 = vpack.c.b16 %v378, %v377
    %v405 = vpack.c.b16 %v380, %v379
    %v406 = vpack.c.b16 %v382, %v381
    %v407 = vpack.c.b16 %v384, %v383
    %v408 = vpack.c.b16 %v386, %v385
    %v409 = vpack.c.b16 %v388, %v387
    %v410 = vpack.c.b16 %v390, %v389
    %v411 = vpack.c.b16 %v392, %v391
    %v412 = vpack.c.b16 %v394, %v393
    %v413 = vpack.c.b16 %v396, %v395
    %v414 = vpack.c.b16 %v398, %v397
    %431 = vmatprep.subr.bf16.mxu0 0
    %432 = vmatpush1.bf16.msra.mxu0 %v399
    %433 = vmatprep.subr.bf16.mxu0 0
    %434 = vmatpush1.bf16.msra.mxu0 %v400
    %435 = vmatprep.subr.bf16.mxu0 0
    %436 = vmatpush1.bf16.msra.mxu0 %v401
    %437 = vmatprep.subr.bf16.mxu0 0
    %438 = vmatpush1.bf16.msra.mxu0 %v402
    %439 = vmatprep.subr.bf16.mxu0 0
    %440 = vmatpush1.bf16.msra.mxu0 %v403
    %441 = vmatprep.subr.bf16.mxu0 0
    %442 = vmatpush1.bf16.msra.mxu0 %v404
    %443 = vmatprep.subr.bf16.mxu0 0
    %444 = vmatpush1.bf16.msra.mxu0 %v405
    %445 = vmatprep.subr.bf16.mxu0 0
    %446 = vmatpush1.bf16.msra.mxu0 %v406
    %447 = vmatprep.subr.bf16.mxu0 0
    %448 = vmatpush1.bf16.msra.mxu0 %v407
    %449 = vmatprep.subr.bf16.mxu0 0
    %450 = vmatpush1.bf16.msra.mxu0 %v408
    %451 = vmatprep.subr.bf16.mxu0 0
    %452 = vmatpush1.bf16.msra.mxu0 %v409
    %453 = vmatprep.subr.bf16.mxu0 0
    %454 = vmatpush1.bf16.msra.mxu0 %v410
    %455 = vmatprep.subr.bf16.mxu0 0
    %456 = vmatpush1.bf16.msra.mxu0 %v411
    %457 = vmatprep.subr.bf16.mxu0 0
    %458 = vmatpush1.bf16.msra.mxu0 %v412
    %459 = vmatprep.subr.bf16.mxu0 0
    %460 = vmatpush1.bf16.msra.mxu0 %v413
    %461 = vmatprep.subr.bf16.mxu0 0
    %462 = vmatpush1.bf16.msra.mxu0 %v414
    %463 = vmatprep.mubr.bf16.mxu0 %v295
    %464 = vmatmul.mubr.bf16.gmra.mrb[0].mxu0 %v294
    %v465 = vpop.f32.mrb[0].mxu0
    %v466 = vadd.f32 %v333, %v465
    %v467 = vpop.f32.mrb[0].mxu0
    %v468 = vpop.f32.mrb[0].mxu0
    %v469 = vpop.f32.mrb[0].mxu0
    %470 = vdwg.mxu0
    %v471 = vadd.f32 %v466, %v113
    %472 = vadd.xlane.f32.xlu0 %v471
    %v473 = vpop.xlane.xlu0 %472
    %v474 = vmul.f32 %v473, %v116
    %v475 = vsub.f32 %v471, %v474
    %v476 = vmul.f32 %v475, %v475
    %477 = vadd.xlane.f32.xlu0 %v476
    %v478 = vpop.xlane.xlu0 %477
    %v479 = vmul.f32 %v478, %v116
    %v480 = vadd.f32 %v479, 1e-05
    %v481 = vrsqrt.pop %v480
    %v482 = vmul.f32 %v475, %v481
    %v483 = vld [vmem:[#allocation11] sm:$0x1]
    %v485 = vlaneseq
    %v486 = vshrl.u32 %v485, 7
    %v487 = vsub.s32 0, %v486
    %v488 = vrot.slane %v483, %v487
    %v490 = vmul.f32 %v482, %v488
    %v491 = vld [vmem:[#allocation13] sm:$0x1]
    %v493 = vlaneseq
    %v494 = vshrl.u32 %v493, 7
    %v495 = vsub.s32 0, %v494
    %v496 = vrot.slane %v491, %v495
    %v498 = vadd.f32 %v490, %v496
    %499 = vst [vmem:[#allocation14] sm:$0xff] %v498
    // Predicated region
    $region58: #{tpu_custom_call.1} parent=1 // pred_check
      _
    $region59: #{tpu_custom_call.1} parent=1 // pred_check_branch
      %501 = sbr.rel (0) target = $region61
    $region60: #{tpu_custom_call.1} parent=1 // pred_region
      %s503 = ssub.s32 128, 128
      %504 = vsyncadd [#allocation4], %s503
      %s506 = sshll.u32 [#allocation14], 4
      %s507 = int_to_ptr.vmem [resolvable:$true] %s506
      %509 = dma.vmem_to_hbm [thread:$0]  %s507, 128, %s7, [#allocation4]
    $region61: #{tpu_custom_call.1} parent=1 // pred_fallthru
      _
    // Predicated region
    $region62: #{tpu_custom_call.1} parent=1 // pred_check
      _
    $region63: #{tpu_custom_call.1} parent=1 // pred_check_branch
      %511 = sbr.rel (0) target = $region65
    $region64: #{tpu_custom_call.1} parent=1 // pred_region
      %512 = dma.done [#allocation4], 128
    $region65: #{tpu_custom_call.1} parent=1 // pred_fallthru
      _
    %513 = vsyncpa [#allocation3], 1
    %514 = vsyncpa [#allocation6], 1
    %515 = vsyncpa [#allocation9], 1
    %516 = vsyncpa [#allocation12], 1
    %517 = vsyncpa [#allocation4], 1

// kernel: tpu_custom_call.1
$region0: #{tpu_custom_call.1}
  #allocation0 [shape = 'u32[]', space=smem, size = 0x4, offset = 0x4, fixed_abs, tag = 'smem constant byte address 0x4 - core index']
  #allocation1 [shape = 'u32[144,128]{1,0:T(1,128)}', space=vmem, size = 0x12000, scoped, tag = 'internal scratch']
  %s0 = inlined_call_operand.hbm [shape: f32[8,128], index: 0, kind: input, shape index: {}]
  %s1 = inlined_call_operand.hbm [shape: bf16[128,256], index: 1, kind: input, shape index: {}]
  %s2 = inlined_call_operand.hbm [shape: f32[1,256], index: 2, kind: input, shape index: {}]
  %s3 = inlined_call_operand.hbm [shape: bf16[256,128], index: 3, kind: input, shape index: {}]
  %s4 = inlined_call_operand.hbm [shape: f32[1,128], index: 4, kind: input, shape index: {}]
  %s5 = inlined_call_operand.hbm [shape: f32[1,128], index: 5, kind: input, shape index: {}]
  %s6 = inlined_call_operand.hbm [shape: f32[1,128], index: 6, kind: input, shape index: {}]
  %s7 = inlined_call_operand.hbm [shape: f32[8,128], index: 7, kind: output, shape index: {}]
  %s8 = sld [smem:[#allocation0]]
  $region66: #{tpu_custom_call.1} parent=0
    _
  %s10 = ssub.s32 1, %s8
  %s11 = scalar_select 0, %s10, %s8
  $region1: #{tpu_custom_call.1} parent=0
    #allocation2 [shape = 'u8[4096]{0}', space=vmem, size = 0x1000, scoped, tag = 'input window, operand 0, single buffered']
    #allocation3 [shape = 's32[1]{0}', space=sflag, size = 0x4, scoped, tag = 'scoped memory for tpu_custom_call.1']
    #allocation4 [shape = 's32[1]{0}', space=sflag, size = 0x4, scoped, tag = 'scoped memory for tpu_custom_call.1']
    #allocation5 [shape = 'u8[65536]{0}', space=vmem, size = 0x10000, scoped, tag = 'input window, operand 1, single buffered']
    #allocation6 [shape = 's32[1]{0}', space=sflag, size = 0x4, scoped, tag = 'scoped memory for tpu_custom_call.1']
    #allocation7 [shape = 'u8[1024]{0}', space=vmem, size = 0x400, scoped, tag = 'input window, operand 2, single buffered']
    #allocation8 [shape = 'u8[65536]{0}', space=vmem, size = 0x10000, scoped, tag = 'input window, operand 3, single buffered']
    #allocation9 [shape = 's32[1]{0}', space=sflag, size = 0x4, scoped, tag = 'scoped memory for tpu_custom_call.1']
    #allocation10 [shape = 'u8[512]{0}', space=vmem, size = 0x400, scoped, tag = 'input window, operand 4, single buffered']
    #allocation11 [shape = 'u8[512]{0}', space=vmem, size = 0x400, scoped, tag = 'input window, operand 5, single buffered']
    #allocation12 [shape = 's32[1]{0}', space=sflag, size = 0x4, scoped, tag = 'scoped memory for tpu_custom_call.1']
    #allocation13 [shape = 'u8[512]{0}', space=vmem, size = 0x400, scoped, tag = 'input window, operand 6, single buffered']
    #allocation14 [shape = 'u8[4096]{0}', space=vmem, size = 0x1000, scoped, tag = 'output window, operand 0, single buffered']
    %12 = vsyncpa [#allocation3], 0
    %13 = vsyncpa [#allocation6], 0
    %14 = vsyncpa [#allocation9], 0
    %15 = vsyncpa [#allocation12], 0
    %16 = vsyncpa [#allocation4], 0
    // Predicated region
    $region2: #{tpu_custom_call.1} parent=1 // pred_check
      _
    $region3: #{tpu_custom_call.1} parent=1 // pred_check_branch
      %18 = sbr.rel (0) target = $region5
    $region4: #{tpu_custom_call.1} parent=1 // pred_region
      %s20 = ssub.s32 128, 128
      %21 = vsyncadd [#allocation3], %s20
      %s23 = sshll.u32 [#allocation2], 4
      %s24 = int_to_ptr.vmem [resolvable:$true] %s23
      %26 = dma.hbm_to_vmem [thread:$0]  %s0, 128, %s24, [#allocation3]
    $region5: #{tpu_custom_call.1} parent=1 // pred_fallthru
      _
    // Predicated region
    $region6: #{tpu_custom_call.1} parent=1 // pred_check
      _
    $region7: #{tpu_custom_call.1} parent=1 // pred_check_branch
      %28 = sbr.rel (0) target = $region9
    $region8: #{tpu_custom_call.1} parent=1 // pred_region
      %s30 = ssub.s32 2048, 2048
      %31 = vsyncadd [#allocation6], %s30
      %s32 = sshll.u32 [#allocation5], 4
      %s33 = int_to_ptr.vmem [resolvable:$true] %s32
      %38 = dma.hbm_to_vmem [thread:$0]  %s1, 2048, %s33, [#allocation6], 128, 128, 8
    $region9: #{tpu_custom_call.1} parent=1 // pred_fallthru
      _
    // Predicated region
    $region10: #{tpu_custom_call.1} parent=1 // pred_check
      _
    $region11: #{tpu_custom_call.1} parent=1 // pred_check_branch
      %40 = sbr.rel (0) target = $region13
    $region12: #{tpu_custom_call.1} parent=1 // pred_region
      %s42 = ssub.s32 32, 32
      %43 = vsyncadd [#allocation6], %s42
      %s45 = sshll.u32 [#allocation7], 4
      %s46 = int_to_ptr.vmem [resolvable:$true] %s45
      %48 = dma.hbm_to_vmem [thread:$0]  %s2, 32, %s46, [#allocation6]
    $region13: #{tpu_custom_call.1} parent=1 // pred_fallthru
      _
    // Predicated region
    $region14: #{tpu_custom_call.1} parent=1 // pred_check
      _
    $region15: #{tpu_custom_call.1} parent=1 // pred_check_branch
      %50 = sbr.rel (0) target = $region17
    $region16: #{tpu_custom_call.1} parent=1 // pred_region
      %s52 = ssub.s32 2048, 2048
      %53 = vsyncadd [#allocation9], %s52
      %s54 = sshll.u32 [#allocation8], 4
      %s55 = int_to_ptr.vmem [resolvable:$true] %s54
      %60 = dma.hbm_to_vmem [thread:$0]  %s3, 2048, %s55, [#allocation9], 64, 64, 4
    $region17: #{tpu_custom_call.1} parent=1 // pred_fallthru
      _
    // Predicated region
    $region18: #{tpu_custom_call.1} parent=1 // pred_check
      _
    $region19: #{tpu_custom_call.1} parent=1 // pred_check_branch
      %62 = sbr.rel (0) target = $region21
    $region20: #{tpu_custom_call.1} parent=1 // pred_region
      %s64 = ssub.s32 16, 16
      %65 = vsyncadd [#allocation9], %s64
      %s67 = sshll.u32 [#allocation10], 4
      %s68 = int_to_ptr.vmem [resolvable:$true] %s67
      %70 = dma.hbm_to_vmem [thread:$0]  %s4, 16, %s68, [#allocation9]
    $region21: #{tpu_custom_call.1} parent=1 // pred_fallthru
      _
    // Predicated region
    $region22: #{tpu_custom_call.1} parent=1 // pred_check
      _
    $region23: #{tpu_custom_call.1} parent=1 // pred_check_branch
      %72 = sbr.rel (0) target = $region25
    $region24: #{tpu_custom_call.1} parent=1 // pred_region
      %s74 = ssub.s32 16, 16
      %75 = vsyncadd [#allocation12], %s74
      %s77 = sshll.u32 [#allocation11], 4
      %s78 = int_to_ptr.vmem [resolvable:$true] %s77
      %80 = dma.hbm_to_vmem [thread:$0]  %s5, 16, %s78, [#allocation12]
    $region25: #{tpu_custom_call.1} parent=1 // pred_fallthru
      _
    // Predicated region
    $region26: #{tpu_custom_call.1} parent=1 // pred_check
      _
    $region27: #{tpu_custom_call.1} parent=1 // pred_check_branch
      %82 = sbr.rel (0) target = $region29
    $region28: #{tpu_custom_call.1} parent=1 // pred_region
      %s84 = ssub.s32 16, 16
      %85 = vsyncadd [#allocation12], %s84
      %s87 = sshll.u32 [#allocation13], 4
      %s88 = int_to_ptr.vmem [resolvable:$true] %s87
      %90 = dma.hbm_to_vmem [thread:$0]  %s6, 16, %s88, [#allocation12]
    $region29: #{tpu_custom_call.1} parent=1 // pred_fallthru
      _
    // Predicated region
    $region30: #{tpu_custom_call.1} parent=1 // pred_check
      _
    $region31: #{tpu_custom_call.1} parent=1 // pred_check_branch
      %92 = sbr.rel (0) target = $region33
    $region32: #{tpu_custom_call.1} parent=1 // pred_region
      %93 = dma.done [#allocation3], 128
    $region33: #{tpu_custom_call.1} parent=1 // pred_fallthru
      _
    // Predicated region
    $region34: #{tpu_custom_call.1} parent=1 // pred_check
      _
    $region35: #{tpu_custom_call.1} parent=1 // pred_check_branch
      %95 = sbr.rel (0) target = $region37
    $region36: #{tpu_custom_call.1} parent=1 // pred_region
      %96 = dma.done [#allocation6], 2048
    $region37: #{tpu_custom_call.1} parent=1 // pred_fallthru
      _
    // Predicated region
    $region38: #{tpu_custom_call.1} parent=1 // pred_check
      _
    $region39: #{tpu_custom_call.1} parent=1 // pred_check_branch
      %98 = sbr.rel (0) target = $region41
    $region40: #{tpu_custom_call.1} parent=1 // pred_region
      %99 = dma.done [#allocation6], 32
    $region41: #{tpu_custom_call.1} parent=1 // pred_fallthru
      _
    // Predicated region
    $region42: #{tpu_custom_call.1} parent=1 // pred_check
      _
    $region43: #{tpu_custom_call.1} parent=1 // pred_check_branch
      %101 = sbr.rel (0) target = $region45
    $region44: #{tpu_custom_call.1} parent=1 // pred_region
      %102 = dma.done [#allocation9], 2048
    $region45: #{tpu_custom_call.1} parent=1 // pred_fallthru
      _
    // Predicated region
    $region46: #{tpu_custom_call.1} parent=1 // pred_check
      _
    $region47: #{tpu_custom_call.1} parent=1 // pred_check_branch
      %104 = sbr.rel (0) target = $region49
    $region48: #{tpu_custom_call.1} parent=1 // pred_region
      %105 = dma.done [#allocation9], 16
    $region49: #{tpu_custom_call.1} parent=1 // pred_fallthru
      _
    // Predicated region
    $region50: #{tpu_custom_call.1} parent=1 // pred_check
      _
    $region51: #{tpu_custom_call.1} parent=1 // pred_check_branch
      %107 = sbr.rel (0) target = $region53
    $region52: #{tpu_custom_call.1} parent=1 // pred_region
      %108 = dma.done [#allocation12], 16
    $region53: #{tpu_custom_call.1} parent=1 // pred_fallthru
      _
    // Predicated region
    $region54: #{tpu_custom_call.1} parent=1 // pred_check
      _
    $region55: #{tpu_custom_call.1} parent=1 // pred_check_branch
      %110 = sbr.rel (0) target = $region57
    $region56: #{tpu_custom_call.1} parent=1 // pred_region
      %111 = dma.done [#allocation12], 16
    $region57: #{tpu_custom_call.1} parent=1 // pred_fallthru
      _
    %v113 = vld [vmem:[#allocation2] sm:$0xff]
    %114 = vadd.xlane.f32.xlu0 %v113
    %v115 = vpop.xlane.xlu0 %114
    %v116 = vrcp.pop 128.0
    %v117 = vmul.f32 %v115, %v116
    %v118 = vsub.f32 %v113, %v117
    %v119 = vmul.f32 %v118, %v118
    %120 = vadd.xlane.f32.xlu0 %v119
    %v121 = vpop.xlane.xlu0 %120
    %v122 = vmul.f32 %v121, %v116
    %v123 = vadd.f32 %v122, 1e-05
    %v124 = vrsqrt.pop %v123
    %v125 = vmul.f32 %v118, %v124
    %v126 = vpack.c.bf16 %v125, %v125
    %v127 = vld [vmem:[#allocation5] sm:$0xff]
    %v128 = vld [vmem:[#allocation5 + $0x8] sm:$0xff]
    %v129 = vld [vmem:[#allocation5 + $0x10] sm:$0xff]
    %v130 = vld [vmem:[#allocation5 + $0x18] sm:$0xff]
    %v131 = vld [vmem:[#allocation5 + $0x20] sm:$0xff]
    %v132 = vld [vmem:[#allocation5 + $0x28] sm:$0xff]
    %v133 = vld [vmem:[#allocation5 + $0x30] sm:$0xff]
    %v134 = vld [vmem:[#allocation5 + $0x38] sm:$0xff]
    %v135 = vld [vmem:[#allocation5 + $0x40] sm:$0xff]
    %v136 = vld [vmem:[#allocation5 + $0x48] sm:$0xff]
    %v137 = vld [vmem:[#allocation5 + $0x50] sm:$0xff]
    %v138 = vld [vmem:[#allocation5 + $0x58] sm:$0xff]
    %v139 = vld [vmem:[#allocation5 + $0x60] sm:$0xff]
    %v140 = vld [vmem:[#allocation5 + $0x68] sm:$0xff]
    %v141 = vld [vmem:[#allocation5 + $0x70] sm:$0xff]
    %v142 = vld [vmem:[#allocation5 + $0x78] sm:$0xff]
    %v143 = vld [vmem:[#allocation7] sm:$0x3]
    %v145 = vlaneseq
    %v146 = vshrl.u32 %v145, 7
    %v147 = vsub.s32 0, %v146
    %v148 = vrot.slane %v143, %v147
    %v149 = vlaneseq
    %v150 = vshrl.u32 %v149, 7
    %v151 = vsub.s32 1, %v150
    %v152 = vrot.slane %v143, %v151
    %v171 = vunpack.c.l.b16 %v127
    %v172 = vunpack.c.h.b16 %v127
    %v173 = vunpack.c.l.b16 %v128
    %v174 = vunpack.c.h.b16 %v128
    %v175 = vunpack.c.l.b16 %v129
    %v176 = vunpack.c.h.b16 %v129
    %v177 = vunpack.c.l.b16 %v130
    %v178 = vunpack.c.h.b16 %v130
    %v179 = vunpack.c.l.b16 %v131
    %v180 = vunpack.c.h.b16 %v131
    %v181 = vunpack.c.l.b16 %v132
    %v182 = vunpack.c.h.b16 %v132
    %v183 = vunpack.c.l.b16 %v133
    %v184 = vunpack.c.h.b16 %v133
    %v185 = vunpack.c.l.b16 %v134
    %v186 = vunpack.c.h.b16 %v134
    %v187 = vunpack.c.l.b16 %v135
    %v188 = vunpack.c.h.b16 %v135
    %v189 = vunpack.c.l.b16 %v136
    %v190 = vunpack.c.h.b16 %v136
    %v191 = vunpack.c.l.b16 %v137
    %v192 = vunpack.c.h.b16 %v137
    %v193 = vunpack.c.l.b16 %v138
    %v194 = vunpack.c.h.b16 %v138
    %v195 = vunpack.c.l.b16 %v139
    %v196 = vunpack.c.h.b16 %v139
    %v197 = vunpack.c.l.b16 %v140
    %v198 = vunpack.c.h.b16 %v140
    %v199 = vunpack.c.l.b16 %v141
    %v200 = vunpack.c.h.b16 %v141
    %v201 = vunpack.c.l.b16 %v142
    %v202 = vunpack.c.h.b16 %v142
    %v203 = vpack.c.b16 %v173, %v171
    %v204 = vpack.c.b16 %v174, %v172
    %v205 = vpack.c.b16 %v177, %v175
    %v206 = vpack.c.b16 %v178, %v176
    %v207 = vpack.c.b16 %v181, %v179
    %v208 = vpack.c.b16 %v182, %v180
    %v209 = vpack.c.b16 %v185, %v183
    %v210 = vpack.c.b16 %v186, %v184
    %v211 = vpack.c.b16 %v189, %v187
    %v212 = vpack.c.b16 %v190, %v188
    %v213 = vpack.c.b16 %v193, %v191
    %v214 = vpack.c.b16 %v194, %v192
    %v215 = vpack.c.b16 %v197, %v195
    %v216 = vpack.c.b16 %v198, %v196
    %v217 = vpack.c.b16 %v201, %v199
    %v218 = vpack.c.b16 %v202, %v200
    %235 = vmatprep.subr.bf16.mxu0 %v204
    %236 = vmatpush1.bf16.msra.mxu0 %v203
    %237 = vmatprep.subr.bf16.mxu0 %v206
    %238 = vmatpush1.bf16.msra.mxu0 %v205
    %239 = vmatprep.subr.bf16.mxu0 %v208
    %240 = vmatpush1.bf16.msra.mxu0 %v207
    %241 = vmatprep.subr.bf16.mxu0 %v210
    %242 = vmatpush1.bf16.msra.mxu0 %v209
    %243 = vmatprep.subr.bf16.mxu0 %v212
    %244 = vmatpush1.bf16.msra.mxu0 %v211
    %245 = vmatprep.subr.bf16.mxu0 %v214
    %246 = vmatpush1.bf16.msra.mxu0 %v213
    %247 = vmatprep.subr.bf16.mxu0 %v216
    %248 = vmatpush1.bf16.msra.mxu0 %v215
    %249 = vmatprep.subr.bf16.mxu0 %v218
    %250 = vmatpush1.bf16.msra.mxu0 %v217
    %251 = vmatprep.subr.bf16.mxu0 0
    %252 = vmatpush1.bf16.msra.mxu0 0
    %253 = vmatprep.subr.bf16.mxu0 0
    %254 = vmatpush1.bf16.msra.mxu0 0
    %255 = vmatprep.subr.bf16.mxu0 0
    %256 = vmatpush1.bf16.msra.mxu0 0
    %257 = vmatprep.subr.bf16.mxu0 0
    %258 = vmatpush1.bf16.msra.mxu0 0
    %259 = vmatprep.subr.bf16.mxu0 0
    %260 = vmatpush1.bf16.msra.mxu0 0
    %261 = vmatprep.subr.bf16.mxu0 0
    %262 = vmatpush1.bf16.msra.mxu0 0
    %263 = vmatprep.subr.bf16.mxu0 0
    %264 = vmatpush1.bf16.msra.mxu0 0
    %265 = vmatprep.subr.bf16.mxu0 0
    %266 = vmatpush1.bf16.msra.mxu0 0
    %267 = vmatprep.mubr.bf16.mxu0 0
    %268 = vmatmul.mubr.bf16.gmra.mrb[0].mxu0 %v126
    %v269 = vpop.f32.mrb[0].mxu0
    %v270 = vadd.f32 %v148, %v269
    %v271 = vpop.f32.mrb[0].mxu0
    %v272 = vadd.f32 %v152, %v271
    %v273 = vpop.f32.mrb[0].mxu0
    %v274 = vpop.f32.mrb[0].mxu0
    %275 = vdwg.mxu0
    %v276 = vmul.f32 %v270, %v270
    %v277 = vmul.f32 %v272, %v272
    %v278 = vmul.f32 %v270, %v276
    %v279 = vmul.f32 %v272, %v277
    %v280 = vmul.f32 %v278, 0.044715
    %v281 = vmul.f32 %v279, 0.044715
    %v282 = vadd.f32 %v270, %v280
    %v283 = vadd.f32 %v272, %v281
    %v284 = vmul.f32 %v282, 0.7978846
    %v285 = vmul.f32 %v283, 0.7978846
    %v286 = vtanh.pop %v284
    %v287 = vtanh.pop %v285
    %v288 = vadd.f32 %v286, 1.0
    %v289 = vadd.f32 %v287, 1.0
    %v290 = vmul.f32 %v288, 0.5
    %v291 = vmul.f32 %v289, 0.5
    %v292 = vmul.f32 %v270, %v290
    %v293 = vmul.f32 %v272, %v291
    %v294 = vpack.c.bf16 %v292, %v292
    %v295 = vpack.c.bf16 %v293, %v293
    %v296 = vld [vmem:[#allocation8] sm:$0xf]
    %v297 = vld [vmem:[#allocation8 + $0x4] sm:$0xf]
    %v298 = vld [vmem:[#allocation8 + $0x8] sm:$0xf]
    %v299 = vld [vmem:[#allocation8 + $0xc] sm:$0xf]
    %v300 = vld [vmem:[#allocation8 + $0x10] sm:$0xf]
    %v301 = vld [vmem:[#allocation8 + $0x14] sm:$0xf]
    %v302 = vld [vmem:[#allocation8 + $0x18] sm:$0xf]
    %v303 = vld [vmem:[#allocation8 + $0x1c] sm:$0xf]
    %v304 = vld [vmem:[#allocation8 + $0x20] sm:$0xf]
    %v305 = vld [vmem:[#allocation8 + $0x24] sm:$0xf]
    %v306 = vld [vmem:[#allocation8 + $0x28] sm:$0xf]
    %v307 = vld [vmem:[#allocation8 + $0x2c] sm:$0xf]
    %v308 = vld [vmem:[#allocation8 + $0x30] sm:$0xf]
    %v309 = vld [vmem:[#allocation8 + $0x34] sm:$0xf]
    %v310 = vld [vmem:[#allocation8 + $0x38] sm:$0xf]
    %v311 = vld [vmem:[#allocation8 + $0x3c] sm:$0xf]
    %v312 = vld [vmem:[#allocation8 + $0x40] sm:$0xf]
    %v313 = vld [vmem:[#allocation8 + $0x44] sm:$0xf]
    %v314 = vld [vmem:[#allocation8 + $0x48] sm:$0xf]
    %v315 = vld [vmem:[#allocation8 + $0x4c] sm:$0xf]
    %v316 = vld [vmem:[#allocation8 + $0x50] sm:$0xf]
    %v317 = vld [vmem:[#allocation8 + $0x54] sm:$0xf]
    %v318 = vld [vmem:[#allocation8 + $0x58] sm:$0xf]
    %v319 = vld [vmem:[#allocation8 + $0x5c] sm:$0xf]
    %v320 = vld [vmem:[#allocation8 + $0x60] sm:$0xf]
    %v321 = vld [vmem:[#allocation8 + $0x64] sm:$0xf]
    %v322 = vld [vmem:[#allocation8 + $0x68] sm:$0xf]
    %v323 = vld [vmem:[#allocation8 + $0x6c] sm:$0xf]
    %v324 = vld [vmem:[#allocation8 + $0x70] sm:$0xf]
    %v325 = vld [vmem:[#allocation8 + $0x74] sm:$0xf]
    %v326 = vld [vmem:[#allocation8 + $0x78] sm:$0xf]
    %v327 = vld [vmem:[#allocation8 + $0x7c] sm:$0xf]
    %v328 = vld [vmem:[#allocation10] sm:$0x1]
    %v330 = vlaneseq
    %v331 = vshrl.u32 %v330, 7
    %v332 = vsub.s32 0, %v331
    %v333 = vrot.slane %v328, %v332
    %v367 = vunpack.c.l.b16 %v296
    %v368 = vunpack.c.l.b16 %v297
    %v369 = vunpack.c.l.b16 %v298
    %v370 = vunpack.c.l.b16 %v299
    %v371 = vunpack.c.l.b16 %v300
    %v372 = vunpack.c.l.b16 %v301
    %v373 = vunpack.c.l.b16 %v302
    %v374 = vunpack.c.l.b16 %v303
    %v375 = vunpack.c.l.b16 %v304
    %v376 = vunpack.c.l.b16 %v305
    %v377 = vunpack.c.l.b16 %v306
    %v378 = vunpack.c.l.b16 %v307
    %v379 = vunpack.c.l.b16 %v308
    %v380 = vunpack.c.l.b16 %v309
    %v381 = vunpack.c.l.b16 %v310
    %v382 = vunpack.c.l.b16 %v311
    %v383 = vunpack.c.l.b16 %v312
    %v384 = vunpack.c.l.b16 %v313
    %v385 = vunpack.c.l.b16 %v314
    %v386 = vunpack.c.l.b16 %v315
    %v387 = vunpack.c.l.b16 %v316
    %v388 = vunpack.c.l.b16 %v317
    %v389 = vunpack.c.l.b16 %v318
    %v390 = vunpack.c.l.b16 %v319
    %v391 = vunpack.c.l.b16 %v320
    %v392 = vunpack.c.l.b16 %v321
    %v393 = vunpack.c.l.b16 %v322
    %v394 = vunpack.c.l.b16 %v323
    %v395 = vunpack.c.l.b16 %v324
    %v396 = vunpack.c.l.b16 %v325
    %v397 = vunpack.c.l.b16 %v326
    %v398 = vunpack.c.l.b16 %v327
    %v399 = vpack.c.b16 %v368, %v367
    %v400 = vpack.c.b16 %v370, %v369
    %v401 = vpack.c.b16 %v372, %v371
    %v402 = vpack.c.b16 %v374, %v373
    %v403 = vpack.c.b16 %v376, %v375
    %v404 = vpack.c.b16 %v378, %v377
    %v405 = vpack.c.b16 %v380, %v379
    %v406 = vpack.c.b16 %v382, %v381
    %v407 = vpack.c.b16 %v384, %v383
    %v408 = vpack.c.b16 %v386, %v385
    %v409 = vpack.c.b16 %v388, %v387
    %v410 = vpack.c.b16 %v390, %v389
    %v411 = vpack.c.b16 %v392, %v391
    %v412 = vpack.c.b16 %v394, %v393
    %v413 = vpack.c.b16 %v396, %v395
    %v414 = vpack.c.b16 %v398, %v397
    %431 = vmatprep.subr.bf16.mxu0 0
    %432 = vmatpush1.bf16.msra.mxu0 %v399
    %433 = vmatprep.subr.bf16.mxu0 0
    %434 = vmatpush1.bf16.msra.mxu0 %v400
    %435 = vmatprep.subr.bf16.mxu0 0
    %436 = vmatpush1.bf16.msra.mxu0 %v401
    %437 = vmatprep.subr.bf16.mxu0 0
    %438 = vmatpush1.bf16.msra.mxu0 %v402
    %439 = vmatprep.subr.bf16.mxu0 0
    %440 = vmatpush1.bf16.msra.mxu0 %v403
    %441 = vmatprep.subr.bf16.mxu0 0
    %442 = vmatpush1.bf16.msra.mxu0 %v404
    %443 = vmatprep.subr.bf16.mxu0 0
    %444 = vmatpush1.bf16.msra.mxu0 %v405
    %445 = vmatprep.subr.bf16.mxu0 0
    %446 = vmatpush1.bf16.msra.mxu0 %v406
    %447 = vmatprep.subr.bf16.mxu0 0
    %448 = vmatpush1.bf16.msra.mxu0 %v407
    %449 = vmatprep.subr.bf16.mxu0 0
    %450 = vmatpush1.bf16.msra.mxu0 %v408
    %451 = vmatprep.subr.bf16.mxu0 0
    %452 = vmatpush1.bf16.msra.mxu0 %v409
    %453 = vmatprep.subr.bf16.mxu0 0
    %454 = vmatpush1.bf16.msra.mxu0 %v410
    %455 = vmatprep.subr.bf16.mxu0 0
    %456 = vmatpush1.bf16.msra.mxu0 %v411
    %457 = vmatprep.subr.bf16.mxu0 0
    %458 = vmatpush1.bf16.msra.mxu0 %v412
    %459 = vmatprep.subr.bf16.mxu0 0
    %460 = vmatpush1.bf16.msra.mxu0 %v413
    %461 = vmatprep.subr.bf16.mxu0 0
    %462 = vmatpush1.bf16.msra.mxu0 %v414
    %463 = vmatprep.mubr.bf16.mxu0 %v295
    %464 = vmatmul.mubr.bf16.gmra.mrb[0].mxu0 %v294
    %v465 = vpop.f32.mrb[0].mxu0
    %v466 = vadd.f32 %v333, %v465
    %v467 = vpop.f32.mrb[0].mxu0
    %v468 = vpop.f32.mrb[0].mxu0
    %v469 = vpop.f32.mrb[0].mxu0
    %470 = vdwg.mxu0
    %v471 = vadd.f32 %v466, %v113
    %472 = vadd.xlane.f32.xlu0 %v471
    %v473 = vpop.xlane.xlu0 %472
    %v474 = vmul.f32 %v473, %v116
    %v475 = vsub.f32 %v471, %v474
    %v476 = vmul.f32 %v475, %v475
    %477 = vadd.xlane.f32.xlu0 %v476
    %v478 = vpop.xlane.xlu0 %477
    %v479 = vmul.f32 %v478, %v116
    %v480 = vadd.f32 %v479, 1e-05
    %v481 = vrsqrt.pop %v480
    %v482 = vmul.f32 %v475, %v481
    %v483 = vld [vmem:[#allocation11] sm:$0x1]
    %v485 = vlaneseq
    %v486 = vshrl.u32 %v485, 7
    %v487 = vsub.s32 0, %v486
    %v488 = vrot.slane %v483, %v487
    %v490 = vmul.f32 %v482, %v488
    %v491 = vld [vmem:[#allocation13] sm:$0x1]
    %v493 = vlaneseq
    %v494 = vshrl.u32 %v493, 7
    %v495 = vsub.s32 0, %v494
    %v496 = vrot.slane %v491, %v495
    %v498 = vadd.f32 %v490, %v496
    %499 = vst [vmem:[#allocation14] sm:$0xff] %v498
    // Predicated region
    $region58: #{tpu_custom_call.1} parent=1 // pred_check
      _
    $region59: #{tpu_custom_call.1} parent=1 // pred_check_branch
      %501 = sbr.rel (0) target = $region61
    $region60: #{tpu_custom_call.1} parent=1 // pred_region
      %s503 = ssub.s32 128, 128
      %504 = vsyncadd [#allocation4], %s503
      %s506 = sshll.u32 [#allocation14], 4
      %s507 = int_to_ptr.vmem [resolvable:$true] %s506
      %509 = dma.vmem_to_hbm [thread:$0]  %s507, 128, %s7, [#allocation4]
    $region61: #{tpu_custom_call.1} parent=1 // pred_fallthru
      _
    // Predicated region
    $region62: #{tpu_custom_call.1} parent=1 // pred_check
      _
    $region63: #{tpu_custom_call.1} parent=1 // pred_check_branch
      %511 = sbr.rel (0) target = $region65
    $region64: #{tpu_custom_call.1} parent=1 // pred_region
      %512 = dma.done [#allocation4], 128
    $region65: #{tpu_custom_call.1} parent=1 // pred_fallthru
      _
    %513 = vsyncpa [#allocation3], 1
    %514 = vsyncpa [#allocation6], 1
    %515 = vsyncpa [#allocation9], 1
    %516 = vsyncpa [#allocation12], 1
    %517 = vsyncpa [#allocation4], 1

</llo_original>
